<compile_context>
chip_gen: v6e
topology: v6e:2x2x1
jax: 0.10.0
libtpu: 0.0.40
codegen_flags: <defaults>
</compile_context>

<pallas_src>
import functools

import numpy as np

import jax
import jax.numpy as jnp
from jax import lax
from jax.experimental import pallas as pl
from jax.experimental.pallas import tpu as pltpu


def _sepconv_same_kernel(x_ref, dw_ref, pw_ref, shift_ref, mask_ref, o_ref, *,
                         K, dilation, padding, W):
    """Fast path: stride == 1, 'same' spatial size; spatial flattened on lanes."""
    B, C_in, HW = x_ref.shape
    C_out = o_ref.shape[1]

    dw = dw_ref[...].astype(jnp.float32)       # (C_in, K*K)   depthwise taps
    pw = pw_ref[...].astype(jnp.float32)       # (C_out, C_in) pointwise * BN scale
    shift = shift_ref[...].astype(jnp.float32)  # (C_out, 1)   BN shift (+ pw bias)
    mask = mask_ref[...].astype(jnp.float32)    # (K*K, HW)    {0,1} zero-pad mask

    # Static per-tap lane shifts in the flattened row-major spatial index.
    shifts = []
    for kh in range(K):
        for kw in range(K):
            off = (kh * dilation - padding) * W + (kw * dilation - padding)
            shifts.append((-off) % HW)

    for b in range(B):                          # images packed in this step (unrolled)
        xb = jnp.maximum(x_ref[b].astype(jnp.float32), 0.0)     # fused ReLU
        # Depthwise KxK conv: per-tap lane roll (XLU) + padding mask + MAC (VPU).
        acc = jnp.zeros((C_in, HW), jnp.float32)
        for kk in range(K * K):
            shifted = xb if shifts[kk] == 0 else pltpu.roll(xb, shifts[kk], axis=1)
            acc = acc + (shifted * mask[kk:kk + 1, :]) * dw[:, kk:kk + 1]
        # Pointwise 1x1 conv on the VPU (C_in broadcast MACs); BN scale pre-folded.
        out = jnp.zeros((C_out, HW), jnp.float32)
        for ci in range(C_in):
            out = out + pw[:, ci:ci + 1] * acc[ci:ci + 1, :]
        o_ref[b] = (out + shift).astype(o_ref.dtype)            # lane-dense store


def _sepconv_general_kernel(x_ref, dw_ref, pw_ref, shift_ref, o_ref, *,
                            K, stride, dilation, H_out, W_out):
    """General fallback (stride > 1 or non-'same' padding): pre-padded NCHW input.

    TODO(synk): validate the stride>1 strided-ds loads and the tiny-weight
    reshapes under interpret mode before relying on this path; output is not
    lane-dense here.
    """
    C_in = x_ref.shape[1]
    C_out = o_ref.shape[1]
    dw = dw_ref[...].astype(jnp.float32)        # (C_in, K*K)
    pw = pw_ref[...].astype(jnp.float32)        # (C_out, C_in)
    acc = jnp.zeros((C_in, H_out, W_out), jnp.float32)
    for kh in range(K):
        for kw in range(K):
            h0 = kh * dilation
            w0 = kw * dilation
            if stride == 1:
                tap = x_ref[0, :, h0:h0 + H_out, w0:w0 + W_out]
            else:
                tap = x_ref[0, :, pl.ds(h0, H_out, stride=stride),
                            pl.ds(w0, W_out, stride=stride)]
            kk = kh * K + kw
            acc = acc + tap.astype(jnp.float32) * dw[:, kk:kk + 1].reshape(C_in, 1, 1)
    out = jnp.zeros((C_out, H_out, W_out), jnp.float32)
    for ci in range(C_in):
        out = out + pw[:, ci:ci + 1].reshape(C_out, 1, 1) * acc[ci:ci + 1]
    out = out + shift_ref[...].reshape(C_out, 1, 1)
    o_ref[0] = out.astype(o_ref.dtype)


def _pick_batch_block(n, per_image_bytes):
    """Pack several tiny images per grid step (amortise per-step overhead) but
    keep >= 8 steps when the batch is large so each megacore half can pipeline."""
    budget = 1 << 20                            # ~1 MiB of activations per step
    best = 1
    for b in range(1, min(n, 8) + 1):
        if n % b:
            continue
        if b * per_image_bytes > budget:
            break
        if n <= 8 or n // b >= 8:
            best = b
    return best


def sep_conv(x, dw_weight, pw_weight, bn_gamma, bn_beta, bn_mean, bn_var,
             *, stride=1, padding=1, dilation=1, pw_bias=None, eps=1e-5):
    """SepConv forward (eval-mode BatchNorm).

    x:          (N, C_in, H, W)       NCHW, same as PyTorch
    dw_weight:  (C_in, 1, K, K)       PyTorch depthwise-conv layout
    pw_weight:  (C_out, C_in, 1, 1)   PyTorch pointwise-conv layout
    bn_*:       (C_out,)              BatchNorm2d params / running stats
    """
    N, C_in, H, W = x.shape
    C_out = pw_weight.shape[0]
    K = dw_weight.shape[-1]

    H_out = (H + 2 * padding - dilation * (K - 1) - 1) // stride + 1
    W_out = (W + 2 * padding - dilation * (K - 1) - 1) // stride + 1

    # Fold BatchNorm running stats (+ optional pointwise bias) into the
    # pointwise weights (scale) and a per-channel shift.
    scale = bn_gamma * lax.rsqrt(bn_var + eps)                           # (C_out,)
    bias = pw_bias if pw_bias is not None else jnp.zeros((C_out,), jnp.float32)
    shift_col = (bn_beta + (bias - bn_mean) * scale).astype(jnp.float32).reshape(C_out, 1)
    pw2d = (pw_weight[:, :, 0, 0].astype(jnp.float32) * scale[:, None])  # (C_out, C_in)
    dw2d = dw_weight[:, 0, :, :].reshape(C_in, K * K).astype(jnp.float32)

    same = (stride == 1) and (2 * padding == dilation * (K - 1))
    if same:
        # ---------- fast path: flattened spatial on lanes, roll + mask ----------
        HW = H * W
        x_flat = x.reshape(N, C_in, HW)          # free reshape: NCHW kept, no transpose

        # Zero-padding as a precomputed {0,1} mask (trace-time constant).
        s = np.arange(HW)
        r, c = s // W, s % W
        mask_np = np.zeros((K * K, HW), np.float32)
        for kh in range(K):
            for kw in range(K):
                dh = kh * dilation - padding
                dv = kw * dilation - padding
                valid = (r + dh >= 0) & (r + dh < H) & (c + dv >= 0) & (c + dv < W)
                mask_np[kh * K + kw] = valid.astype(np.float32)
        mask = jnp.asarray(mask_np)

        B = _pick_batch_block(N, C_in * HW * x.dtype.itemsize)
        grid = (N // B,)

        kernel = functools.partial(_sepconv_same_kernel, K=K, dilation=dilation,
                                   padding=padding, W=W)
        flops = 2 * N * HW * C_in * (K * K + C_out)
        bytes_accessed = int((x.size + N * C_out * HW) * x.dtype.itemsize
                             + (dw2d.size + pw2d.size + C_out + mask.size) * 4)

        out = pl.pallas_call(
            kernel,
            out_shape=jax.ShapeDtypeStruct((N, C_out, HW), x.dtype),
            grid_spec=pltpu.PrefetchScalarGridSpec(
                num_scalar_prefetch=0,
                grid=grid,
                in_specs=[
                    pl.BlockSpec((B, C_in, HW), lambda n: (n, 0, 0)),
                    pl.BlockSpec((C_in, K * K), lambda n: (0, 0)),
                    pl.BlockSpec((C_out, C_in), lambda n: (0, 0)),
                    pl.BlockSpec((C_out, 1), lambda n: (0, 0)),
                    pl.BlockSpec((K * K, HW), lambda n: (0, 0)),
                ],
                out_specs=pl.BlockSpec((B, C_out, HW), lambda n: (n, 0, 0)),
            ),
            compiler_params=pltpu.CompilerParams(
                dimension_semantics=("parallel",),
                vmem_limit_bytes=32 * 1024 * 1024,
            ),
            cost_estimate=pl.CostEstimate(flops=flops, transcendentals=0,
                                          bytes_accessed=bytes_accessed),
        )(x_flat, dw2d, pw2d, shift_col, mask)

        # Free reshape back to NCHW (H_out == H, W_out == W on this path).
        return out.reshape(N, C_out, H_out, W_out)

    # ---------- general path (stride > 1 / non-'same' padding) ----------
    x_pad = jnp.pad(jnp.maximum(x, 0.0),
                    ((0, 0), (0, 0), (padding, padding), (padding, padding)))
    H_pad, W_pad = H + 2 * padding, W + 2 * padding
    kernel = functools.partial(_sepconv_general_kernel, K=K, stride=stride,
                               dilation=dilation, H_out=H_out, W_out=W_out)
    return pl.pallas_call(
        kernel,
        out_shape=jax.ShapeDtypeStruct((N, C_out, H_out, W_out), x.dtype),
        grid_spec=pltpu.PrefetchScalarGridSpec(
            num_scalar_prefetch=0,
            grid=(N,),
            in_specs=[
                pl.BlockSpec((1, C_in, H_pad, W_pad), lambda n: (n, 0, 0, 0)),
                pl.BlockSpec((C_in, K * K), lambda n: (0, 0)),
                pl.BlockSpec((C_out, C_in), lambda n: (0, 0)),
                pl.BlockSpec((C_out, 1), lambda n: (0, 0)),
            ],
            out_specs=pl.BlockSpec((1, C_out, H_out, W_out), lambda n: (n, 0, 0, 0)),
        ),
        compiler_params=pltpu.CompilerParams(
            dimension_semantics=("parallel",),
            vmem_limit_bytes=32 * 1024 * 1024,
        ),
    )(x_pad, dw2d, pw2d, shift_col)


def sep_conv_ref(x, dw_weight, pw_weight, bn_gamma, bn_beta, bn_mean, bn_var,
                 *, stride=1, padding=1, dilation=1, pw_bias=None, eps=1e-5):
    """Pure-JAX reference matching PyTorch SepConv (eval-mode BN)."""
    C_in = x.shape[1]
    r = jnp.maximum(x, 0.0)
    y = lax.conv_general_dilated(
        r, dw_weight, window_strides=(stride, stride),
        padding=((padding, padding), (padding, padding)),
        rhs_dilation=(dilation, dilation),
        dimension_numbers=("NCHW", "OIHW", "NCHW"),
        feature_group_count=C_in)
    z = lax.conv_general_dilated(
        y, pw_weight, window_strides=(1, 1), padding="VALID",
        dimension_numbers=("NCHW", "OIHW", "NCHW"))
    if pw_bias is not None:
        z = z + pw_bias[None, :, None, None]
    scale = bn_gamma * lax.rsqrt(bn_var + eps)
    shift = bn_beta - bn_mean * scale
    return z * scale[None, :, None, None] + shift[None, :, None, None]


if __name__ == "__main__":
    key = jax.random.PRNGKey(0)
    k1, k2, k3, k4, k5, k6, k7 = jax.random.split(key, 7)

    # SepConv(C_in=4, C_out=8, kernel_size=3, stride=1, padding=1,
    #         dilation=1, affine=True)
    N, C_in, C_out, H, W = 2, 4, 8, 16, 16
    K, stride, padding, dilation, affine = 3, 1, 1, 1, True

    x = jax.random.normal(k1, (N, C_in, H, W), dtype=jnp.float32)
    dw_w = jax.random.normal(k2, (C_in, 1, K, K), dtype=jnp.float32) * 0.2
    pw_w = jax.random.normal(k3, (C_out, C_in, 1, 1), dtype=jnp.float32) * 0.2

    # BatchNorm2d(C_out, affine=True, track_running_stats=True) — eval stats.
    bn_gamma = jax.random.uniform(k4, (C_out,), jnp.float32, 0.5, 1.5)
    bn_beta = jax.random.normal(k5, (C_out,), jnp.float32) * 0.1
    bn_mean = jax.random.normal(k6, (C_out,), jnp.float32) * 0.1
    bn_var = jax.random.uniform(k7, (C_out,), jnp.float32, 0.5, 1.5)
    pw_bias = None  # bias = not affine -> no pointwise bias when affine=True

    y = sep_conv(x, dw_w, pw_w, bn_gamma, bn_beta, bn_mean, bn_var,
                 stride=stride, padding=padding, dilation=dilation,
                 pw_bias=pw_bias)
    jax.block_until_ready(y)

    y_ref = sep_conv_ref(x, dw_w, pw_w, bn_gamma, bn_beta, bn_mean, bn_var,
                         stride=stride, padding=padding, dilation=dilation,
                         pw_bias=pw_bias)
    assert y.shape == (N, C_out, H, W), y.shape
    assert y.dtype == x.dtype, y.dtype
    max_err = float(jnp.max(jnp.abs(y - y_ref)))
    assert jnp.allclose(y, y_ref, rtol=1e-4, atol=1e-4), max_err
    print("KERNEL_OK")
</pallas_src>

<mosaic_0001>
module attributes {stable_mosaic.version = 11 : i64} {
  func.func @_sepconv_same_kernel(%arg0: i32, %arg1: memref<2x4x256xf32, #tpu.memory_space<vmem>>, %arg2: memref<4x9xf32, #tpu.memory_space<vmem>>, %arg3: memref<8x4xf32, #tpu.memory_space<vmem>>, %arg4: memref<8x1xf32, #tpu.memory_space<vmem>>, %arg5: memref<9x256xf32, #tpu.memory_space<vmem>>, %arg6: memref<2x8x256xf32, #tpu.memory_space<vmem>>) attributes {dimension_semantics = [#tpu.dimension_semantics<parallel>], iteration_bounds = array<i64: 1>, scalar_prefetch = 0 : i64, scratch_operands = 0 : i64, tpu.core_type = #tpu.core_type<tc>, window_params = [{transform_indices = @transform_0, window_bounds = array<i64: 2, 4, 256>}, {pipeline_mode = #tpu.pipeline_mode<synchronous>, transform_indices = @transform_1, window_bounds = array<i64: 4, 9>}, {pipeline_mode = #tpu.pipeline_mode<synchronous>, transform_indices = @transform_2, window_bounds = array<i64: 8, 4>}, {pipeline_mode = #tpu.pipeline_mode<synchronous>, transform_indices = @transform_3, window_bounds = array<i64: 8, 1>}, {pipeline_mode = #tpu.pipeline_mode<synchronous>, transform_indices = @transform_4, window_bounds = array<i64: 9, 256>}, {transform_indices = @transform_5, window_bounds = array<i64: 2, 8, 256>}]} {
    %c0 = arith.constant 0 : index
    %c0_0 = arith.constant 0 : index
    %0 = vector.load %arg2[%c0, %c0_0] : memref<4x9xf32, #tpu.memory_space<vmem>>, vector<4x9xf32>
    %c0_1 = arith.constant 0 : index
    %c0_2 = arith.constant 0 : index
    %1 = vector.load %arg3[%c0_1, %c0_2] : memref<8x4xf32, #tpu.memory_space<vmem>>, vector<8x4xf32>
    %c0_3 = arith.constant 0 : index
    %c0_4 = arith.constant 0 : index
    %2 = vector.load %arg4[%c0_3, %c0_4] : memref<8x1xf32, #tpu.memory_space<vmem>>, vector<8x1xf32>
    %c0_5 = arith.constant 0 : index
    %c0_6 = arith.constant 0 : index
    %3 = vector.load %arg5[%c0_5, %c0_6] : memref<9x256xf32, #tpu.memory_space<vmem>>, vector<9x256xf32>
    %c0_7 = arith.constant 0 : index
    %c0_8 = arith.constant 0 : index
    %c0_9 = arith.constant 0 : index
    %4 = vector.load %arg1[%c0_7, %c0_8, %c0_9] : memref<2x4x256xf32, #tpu.memory_space<vmem>>, vector<1x4x256xf32>
    %5 = vector.shape_cast %4 : vector<1x4x256xf32> to vector<4x256xf32>
    %cst = arith.constant 0.000000e+00 : f32
    %6 = vector.broadcast %cst : f32 to vector<4x256xf32>
    %7 = arith.maximumf %5, %6 : vector<4x256xf32>
    %cst_10 = arith.constant 0.000000e+00 : f32
    %8 = vector.broadcast %cst_10 : f32 to vector<4x256xf32>
    %c17_i32 = arith.constant 17 : i32
    %9 = tpu.dynamic_rotate %7 by %c17_i32 dim 1 : vector<4x256xf32>, i32 -> vector<4x256xf32>
    %10 = vector.extract_strided_slice %3 {offsets = [0, 0], sizes = [1, 256], strides = [1, 1]} : vector<9x256xf32> to vector<1x256xf32>
    %11 = vector.broadcast %10 : vector<1x256xf32> to vector<4x256xf32>
    %12 = arith.mulf %9, %11 : vector<4x256xf32>
    %13 = vector.extract_strided_slice %0 {offsets = [0, 0], sizes = [4, 1], strides = [1, 1]} : vector<4x9xf32> to vector<4x1xf32>
    %14 = vector.broadcast %13 : vector<4x1xf32> to vector<4x256xf32>
    %15 = arith.mulf %12, %14 : vector<4x256xf32>
    %16 = arith.addf %8, %15 : vector<4x256xf32>
    %c16_i32 = arith.constant 16 : i32
    %17 = tpu.dynamic_rotate %7 by %c16_i32 dim 1 : vector<4x256xf32>, i32 -> vector<4x256xf32>
    %18 = vector.extract_strided_slice %3 {offsets = [1, 0], sizes = [1, 256], strides = [1, 1]} : vector<9x256xf32> to vector<1x256xf32>
    %19 = vector.broadcast %18 : vector<1x256xf32> to vector<4x256xf32>
    %20 = arith.mulf %17, %19 : vector<4x256xf32>
    %21 = vector.extract_strided_slice %0 {offsets = [0, 1], sizes = [4, 1], strides = [1, 1]} : vector<4x9xf32> to vector<4x1xf32>
    %22 = vector.broadcast %21 : vector<4x1xf32> to vector<4x256xf32>
    %23 = arith.mulf %20, %22 : vector<4x256xf32>
    %24 = arith.addf %16, %23 : vector<4x256xf32>
    %c15_i32 = arith.constant 15 : i32
    %25 = tpu.dynamic_rotate %7 by %c15_i32 dim 1 : vector<4x256xf32>, i32 -> vector<4x256xf32>
    %26 = vector.extract_strided_slice %3 {offsets = [2, 0], sizes = [1, 256], strides = [1, 1]} : vector<9x256xf32> to vector<1x256xf32>
    %27 = vector.broadcast %26 : vector<1x256xf32> to vector<4x256xf32>
    %28 = arith.mulf %25, %27 : vector<4x256xf32>
    %29 = vector.extract_strided_slice %0 {offsets = [0, 2], sizes = [4, 1], strides = [1, 1]} : vector<4x9xf32> to vector<4x1xf32>
    %30 = vector.broadcast %29 : vector<4x1xf32> to vector<4x256xf32>
    %31 = arith.mulf %28, %30 : vector<4x256xf32>
    %32 = arith.addf %24, %31 : vector<4x256xf32>
    %c1_i32 = arith.constant 1 : i32
    %33 = tpu.dynamic_rotate %7 by %c1_i32 dim 1 : vector<4x256xf32>, i32 -> vector<4x256xf32>
    %34 = vector.extract_strided_slice %3 {offsets = [3, 0], sizes = [1, 256], strides = [1, 1]} : vector<9x256xf32> to vector<1x256xf32>
    %35 = vector.broadcast %34 : vector<1x256xf32> to vector<4x256xf32>
    %36 = arith.mulf %33, %35 : vector<4x256xf32>
    %37 = vector.extract_strided_slice %0 {offsets = [0, 3], sizes = [4, 1], strides = [1, 1]} : vector<4x9xf32> to vector<4x1xf32>
    %38 = vector.broadcast %37 : vector<4x1xf32> to vector<4x256xf32>
    %39 = arith.mulf %36, %38 : vector<4x256xf32>
    %40 = arith.addf %32, %39 : vector<4x256xf32>
    %41 = vector.extract_strided_slice %3 {offsets = [4, 0], sizes = [1, 256], strides = [1, 1]} : vector<9x256xf32> to vector<1x256xf32>
    %42 = vector.broadcast %41 : vector<1x256xf32> to vector<4x256xf32>
    %43 = arith.mulf %7, %42 : vector<4x256xf32>
    %44 = vector.extract_strided_slice %0 {offsets = [0, 4], sizes = [4, 1], strides = [1, 1]} : vector<4x9xf32> to vector<4x1xf32>
    %45 = vector.broadcast %44 : vector<4x1xf32> to vector<4x256xf32>
    %46 = arith.mulf %43, %45 : vector<4x256xf32>
    %47 = arith.addf %40, %46 : vector<4x256xf32>
    %c255_i32 = arith.constant 255 : i32
    %48 = tpu.dynamic_rotate %7 by %c255_i32 dim 1 : vector<4x256xf32>, i32 -> vector<4x256xf32>
    %49 = vector.extract_strided_slice %3 {offsets = [5, 0], sizes = [1, 256], strides = [1, 1]} : vector<9x256xf32> to vector<1x256xf32>
    %50 = vector.broadcast %49 : vector<1x256xf32> to vector<4x256xf32>
    %51 = arith.mulf %48, %50 : vector<4x256xf32>
    %52 = vector.extract_strided_slice %0 {offsets = [0, 5], sizes = [4, 1], strides = [1, 1]} : vector<4x9xf32> to vector<4x1xf32>
    %53 = vector.broadcast %52 : vector<4x1xf32> to vector<4x256xf32>
    %54 = arith.mulf %51, %53 : vector<4x256xf32>
    %55 = arith.addf %47, %54 : vector<4x256xf32>
    %c241_i32 = arith.constant 241 : i32
    %56 = tpu.dynamic_rotate %7 by %c241_i32 dim 1 : vector<4x256xf32>, i32 -> vector<4x256xf32>
    %57 = vector.extract_strided_slice %3 {offsets = [6, 0], sizes = [1, 256], strides = [1, 1]} : vector<9x256xf32> to vector<1x256xf32>
    %58 = vector.broadcast %57 : vector<1x256xf32> to vector<4x256xf32>
    %59 = arith.mulf %56, %58 : vector<4x256xf32>
    %60 = vector.extract_strided_slice %0 {offsets = [0, 6], sizes = [4, 1], strides = [1, 1]} : vector<4x9xf32> to vector<4x1xf32>
    %61 = vector.broadcast %60 : vector<4x1xf32> to vector<4x256xf32>
    %62 = arith.mulf %59, %61 : vector<4x256xf32>
    %63 = arith.addf %55, %62 : vector<4x256xf32>
    %c240_i32 = arith.constant 240 : i32
    %64 = tpu.dynamic_rotate %7 by %c240_i32 dim 1 : vector<4x256xf32>, i32 -> vector<4x256xf32>
    %65 = vector.extract_strided_slice %3 {offsets = [7, 0], sizes = [1, 256], strides = [1, 1]} : vector<9x256xf32> to vector<1x256xf32>
    %66 = vector.broadcast %65 : vector<1x256xf32> to vector<4x256xf32>
    %67 = arith.mulf %64, %66 : vector<4x256xf32>
    %68 = vector.extract_strided_slice %0 {offsets = [0, 7], sizes = [4, 1], strides = [1, 1]} : vector<4x9xf32> to vector<4x1xf32>
    %69 = vector.broadcast %68 : vector<4x1xf32> to vector<4x256xf32>
    %70 = arith.mulf %67, %69 : vector<4x256xf32>
    %71 = arith.addf %63, %70 : vector<4x256xf32>
    %c239_i32 = arith.constant 239 : i32
    %72 = tpu.dynamic_rotate %7 by %c239_i32 dim 1 : vector<4x256xf32>, i32 -> vector<4x256xf32>
    %73 = vector.extract_strided_slice %3 {offsets = [8, 0], sizes = [1, 256], strides = [1, 1]} : vector<9x256xf32> to vector<1x256xf32>
    %74 = vector.broadcast %73 : vector<1x256xf32> to vector<4x256xf32>
    %75 = arith.mulf %72, %74 : vector<4x256xf32>
    %76 = vector.extract_strided_slice %0 {offsets = [0, 8], sizes = [4, 1], strides = [1, 1]} : vector<4x9xf32> to vector<4x1xf32>
    %77 = vector.broadcast %76 : vector<4x1xf32> to vector<4x256xf32>
    %78 = arith.mulf %75, %77 : vector<4x256xf32>
    %79 = arith.addf %71, %78 : vector<4x256xf32>
    %cst_11 = arith.constant 0.000000e+00 : f32
    %80 = vector.broadcast %cst_11 : f32 to vector<8x256xf32>
    %81 = vector.extract_strided_slice %1 {offsets = [0, 0], sizes = [8, 1], strides = [1, 1]} : vector<8x4xf32> to vector<8x1xf32>
    %82 = vector.extract_strided_slice %79 {offsets = [0, 0], sizes = [1, 256], strides = [1, 1]} : vector<4x256xf32> to vector<1x256xf32>
    %83 = vector.broadcast %81 : vector<8x1xf32> to vector<8x256xf32>
    %84 = vector.broadcast %82 : vector<1x256xf32> to vector<8x256xf32>
    %85 = arith.mulf %83, %84 : vector<8x256xf32>
    %86 = arith.addf %80, %85 : vector<8x256xf32>
    %87 = vector.extract_strided_slice %1 {offsets = [0, 1], sizes = [8, 1], strides = [1, 1]} : vector<8x4xf32> to vector<8x1xf32>
    %88 = vector.extract_strided_slice %79 {offsets = [1, 0], sizes = [1, 256], strides = [1, 1]} : vector<4x256xf32> to vector<1x256xf32>
    %89 = vector.broadcast %87 : vector<8x1xf32> to vector<8x256xf32>
    %90 = vector.broadcast %88 : vector<1x256xf32> to vector<8x256xf32>
    %91 = arith.mulf %89, %90 : vector<8x256xf32>
    %92 = arith.addf %86, %91 : vector<8x256xf32>
    %93 = vector.extract_strided_slice %1 {offsets = [0, 2], sizes = [8, 1], strides = [1, 1]} : vector<8x4xf32> to vector<8x1xf32>
    %94 = vector.extract_strided_slice %79 {offsets = [2, 0], sizes = [1, 256], strides = [1, 1]} : vector<4x256xf32> to vector<1x256xf32>
    %95 = vector.broadcast %93 : vector<8x1xf32> to vector<8x256xf32>
    %96 = vector.broadcast %94 : vector<1x256xf32> to vector<8x256xf32>
    %97 = arith.mulf %95, %96 : vector<8x256xf32>
    %98 = arith.addf %92, %97 : vector<8x256xf32>
    %99 = vector.extract_strided_slice %1 {offsets = [0, 3], sizes = [8, 1], strides = [1, 1]} : vector<8x4xf32> to vector<8x1xf32>
    %100 = vector.extract_strided_slice %79 {offsets = [3, 0], sizes = [1, 256], strides = [1, 1]} : vector<4x256xf32> to vector<1x256xf32>
    %101 = vector.broadcast %99 : vector<8x1xf32> to vector<8x256xf32>
    %102 = vector.broadcast %100 : vector<1x256xf32> to vector<8x256xf32>
    %103 = arith.mulf %101, %102 : vector<8x256xf32>
    %104 = arith.addf %98, %103 : vector<8x256xf32>
    %105 = vector.broadcast %2 : vector<8x1xf32> to vector<8x256xf32>
    %106 = arith.addf %104, %105 : vector<8x256xf32>
    %c0_12 = arith.constant 0 : index
    %c0_13 = arith.constant 0 : index
    %c0_14 = arith.constant 0 : index
    %107 = vector.load %arg6[%c0_12, %c0_13, %c0_14] : memref<2x8x256xf32, #tpu.memory_space<vmem>>, vector<1x8x256xf32>
    %108 = vector.shape_cast %107 : vector<1x8x256xf32> to vector<8x256xf32>
    %109 = vector.shape_cast %106 : vector<8x256xf32> to vector<1x8x256xf32>
    tpu.vector_store %arg6[%c0_12, %c0_13, %c0_14], %109 {strides = array<i32>} : memref<2x8x256xf32, #tpu.memory_space<vmem>>, vector<1x8x256xf32>,
    %c1 = arith.constant 1 : index
    %c0_15 = arith.constant 0 : index
    %c0_16 = arith.constant 0 : index
    %110 = vector.load %arg1[%c1, %c0_15, %c0_16] : memref<2x4x256xf32, #tpu.memory_space<vmem>>, vector<1x4x256xf32>
    %111 = vector.shape_cast %110 : vector<1x4x256xf32> to vector<4x256xf32>
    %cst_17 = arith.constant 0.000000e+00 : f32
    %112 = vector.broadcast %cst_17 : f32 to vector<4x256xf32>
    %113 = arith.maximumf %111, %112 : vector<4x256xf32>
    %cst_18 = arith.constant 0.000000e+00 : f32
    %114 = vector.broadcast %cst_18 : f32 to vector<4x256xf32>
    %c17_i32_19 = arith.constant 17 : i32
    %115 = tpu.dynamic_rotate %113 by %c17_i32_19 dim 1 : vector<4x256xf32>, i32 -> vector<4x256xf32>
    %116 = vector.extract_strided_slice %3 {offsets = [0, 0], sizes = [1, 256], strides = [1, 1]} : vector<9x256xf32> to vector<1x256xf32>
    %117 = vector.broadcast %116 : vector<1x256xf32> to vector<4x256xf32>
    %118 = arith.mulf %115, %117 : vector<4x256xf32>
    %119 = vector.extract_strided_slice %0 {offsets = [0, 0], sizes = [4, 1], strides = [1, 1]} : vector<4x9xf32> to vector<4x1xf32>
    %120 = vector.broadcast %119 : vector<4x1xf32> to vector<4x256xf32>
    %121 = arith.mulf %118, %120 : vector<4x256xf32>
    %122 = arith.addf %114, %121 : vector<4x256xf32>
    %c16_i32_20 = arith.constant 16 : i32
    %123 = tpu.dynamic_rotate %113 by %c16_i32_20 dim 1 : vector<4x256xf32>, i32 -> vector<4x256xf32>
    %124 = vector.extract_strided_slice %3 {offsets = [1, 0], sizes = [1, 256], strides = [1, 1]} : vector<9x256xf32> to vector<1x256xf32>
    %125 = vector.broadcast %124 : vector<1x256xf32> to vector<4x256xf32>
    %126 = arith.mulf %123, %125 : vector<4x256xf32>
    %127 = vector.extract_strided_slice %0 {offsets = [0, 1], sizes = [4, 1], strides = [1, 1]} : vector<4x9xf32> to vector<4x1xf32>
    %128 = vector.broadcast %127 : vector<4x1xf32> to vector<4x256xf32>
    %129 = arith.mulf %126, %128 : vector<4x256xf32>
    %130 = arith.addf %122, %129 : vector<4x256xf32>
    %c15_i32_21 = arith.constant 15 : i32
    %131 = tpu.dynamic_rotate %113 by %c15_i32_21 dim 1 : vector<4x256xf32>, i32 -> vector<4x256xf32>
    %132 = vector.extract_strided_slice %3 {offsets = [2, 0], sizes = [1, 256], strides = [1, 1]} : vector<9x256xf32> to vector<1x256xf32>
    %133 = vector.broadcast %132 : vector<1x256xf32> to vector<4x256xf32>
    %134 = arith.mulf %131, %133 : vector<4x256xf32>
    %135 = vector.extract_strided_slice %0 {offsets = [0, 2], sizes = [4, 1], strides = [1, 1]} : vector<4x9xf32> to vector<4x1xf32>
    %136 = vector.broadcast %135 : vector<4x1xf32> to vector<4x256xf32>
    %137 = arith.mulf %134, %136 : vector<4x256xf32>
    %138 = arith.addf %130, %137 : vector<4x256xf32>
    %c1_i32_22 = arith.constant 1 : i32
    %139 = tpu.dynamic_rotate %113 by %c1_i32_22 dim 1 : vector<4x256xf32>, i32 -> vector<4x256xf32>
    %140 = vector.extract_strided_slice %3 {offsets = [3, 0], sizes = [1, 256], strides = [1, 1]} : vector<9x256xf32> to vector<1x256xf32>
    %141 = vector.broadcast %140 : vector<1x256xf32> to vector<4x256xf32>
    %142 = arith.mulf %139, %141 : vector<4x256xf32>
    %143 = vector.extract_strided_slice %0 {offsets = [0, 3], sizes = [4, 1], strides = [1, 1]} : vector<4x9xf32> to vector<4x1xf32>
    %144 = vector.broadcast %143 : vector<4x1xf32> to vector<4x256xf32>
    %145 = arith.mulf %142, %144 : vector<4x256xf32>
    %146 = arith.addf %138, %145 : vector<4x256xf32>
    %147 = vector.extract_strided_slice %3 {offsets = [4, 0], sizes = [1, 256], strides = [1, 1]} : vector<9x256xf32> to vector<1x256xf32>
    %148 = vector.broadcast %147 : vector<1x256xf32> to vector<4x256xf32>
    %149 = arith.mulf %113, %148 : vector<4x256xf32>
    %150 = vector.extract_strided_slice %0 {offsets = [0, 4], sizes = [4, 1], strides = [1, 1]} : vector<4x9xf32> to vector<4x1xf32>
    %151 = vector.broadcast %150 : vector<4x1xf32> to vector<4x256xf32>
    %152 = arith.mulf %149, %151 : vector<4x256xf32>
    %153 = arith.addf %146, %152 : vector<4x256xf32>
    %c255_i32_23 = arith.constant 255 : i32
    %154 = tpu.dynamic_rotate %113 by %c255_i32_23 dim 1 : vector<4x256xf32>, i32 -> vector<4x256xf32>
    %155 = vector.extract_strided_slice %3 {offsets = [5, 0], sizes = [1, 256], strides = [1, 1]} : vector<9x256xf32> to vector<1x256xf32>
    %156 = vector.broadcast %155 : vector<1x256xf32> to vector<4x256xf32>
    %157 = arith.mulf %154, %156 : vector<4x256xf32>
    %158 = vector.extract_strided_slice %0 {offsets = [0, 5], sizes = [4, 1], strides = [1, 1]} : vector<4x9xf32> to vector<4x1xf32>
    %159 = vector.broadcast %158 : vector<4x1xf32> to vector<4x256xf32>
    %160 = arith.mulf %157, %159 : vector<4x256xf32>
    %161 = arith.addf %153, %160 : vector<4x256xf32>
    %c241_i32_24 = arith.constant 241 : i32
    %162 = tpu.dynamic_rotate %113 by %c241_i32_24 dim 1 : vector<4x256xf32>, i32 -> vector<4x256xf32>
    %163 = vector.extract_strided_slice %3 {offsets = [6, 0], sizes = [1, 256], strides = [1, 1]} : vector<9x256xf32> to vector<1x256xf32>
    %164 = vector.broadcast %163 : vector<1x256xf32> to vector<4x256xf32>
    %165 = arith.mulf %162, %164 : vector<4x256xf32>
    %166 = vector.extract_strided_slice %0 {offsets = [0, 6], sizes = [4, 1], strides = [1, 1]} : vector<4x9xf32> to vector<4x1xf32>
    %167 = vector.broadcast %166 : vector<4x1xf32> to vector<4x256xf32>
    %168 = arith.mulf %165, %167 : vector<4x256xf32>
    %169 = arith.addf %161, %168 : vector<4x256xf32>
    %c240_i32_25 = arith.constant 240 : i32
    %170 = tpu.dynamic_rotate %113 by %c240_i32_25 dim 1 : vector<4x256xf32>, i32 -> vector<4x256xf32>
    %171 = vector.extract_strided_slice %3 {offsets = [7, 0], sizes = [1, 256], strides = [1, 1]} : vector<9x256xf32> to vector<1x256xf32>
    %172 = vector.broadcast %171 : vector<1x256xf32> to vector<4x256xf32>
    %173 = arith.mulf %170, %172 : vector<4x256xf32>
    %174 = vector.extract_strided_slice %0 {offsets = [0, 7], sizes = [4, 1], strides = [1, 1]} : vector<4x9xf32> to vector<4x1xf32>
    %175 = vector.broadcast %174 : vector<4x1xf32> to vector<4x256xf32>
    %176 = arith.mulf %173, %175 : vector<4x256xf32>
    %177 = arith.addf %169, %176 : vector<4x256xf32>
    %c239_i32_26 = arith.constant 239 : i32
    %178 = tpu.dynamic_rotate %113 by %c239_i32_26 dim 1 : vector<4x256xf32>, i32 -> vector<4x256xf32>
    %179 = vector.extract_strided_slice %3 {offsets = [8, 0], sizes = [1, 256], strides = [1, 1]} : vector<9x256xf32> to vector<1x256xf32>
    %180 = vector.broadcast %179 : vector<1x256xf32> to vector<4x256xf32>
    %181 = arith.mulf %178, %180 : vector<4x256xf32>
    %182 = vector.extract_strided_slice %0 {offsets = [0, 8], sizes = [4, 1], strides = [1, 1]} : vector<4x9xf32> to vector<4x1xf32>
    %183 = vector.broadcast %182 : vector<4x1xf32> to vector<4x256xf32>
    %184 = arith.mulf %181, %183 : vector<4x256xf32>
    %185 = arith.addf %177, %184 : vector<4x256xf32>
    %cst_27 = arith.constant 0.000000e+00 : f32
    %186 = vector.broadcast %cst_27 : f32 to vector<8x256xf32>
    %187 = vector.extract_strided_slice %1 {offsets = [0, 0], sizes = [8, 1], strides = [1, 1]} : vector<8x4xf32> to vector<8x1xf32>
    %188 = vector.extract_strided_slice %185 {offsets = [0, 0], sizes = [1, 256], strides = [1, 1]} : vector<4x256xf32> to vector<1x256xf32>
    %189 = vector.broadcast %187 : vector<8x1xf32> to vector<8x256xf32>
    %190 = vector.broadcast %188 : vector<1x256xf32> to vector<8x256xf32>
    %191 = arith.mulf %189, %190 : vector<8x256xf32>
    %192 = arith.addf %186, %191 : vector<8x256xf32>
    %193 = vector.extract_strided_slice %1 {offsets = [0, 1], sizes = [8, 1], strides = [1, 1]} : vector<8x4xf32> to vector<8x1xf32>
    %194 = vector.extract_strided_slice %185 {offsets = [1, 0], sizes = [1, 256], strides = [1, 1]} : vector<4x256xf32> to vector<1x256xf32>
    %195 = vector.broadcast %193 : vector<8x1xf32> to vector<8x256xf32>
    %196 = vector.broadcast %194 : vector<1x256xf32> to vector<8x256xf32>
    %197 = arith.mulf %195, %196 : vector<8x256xf32>
    %198 = arith.addf %192, %197 : vector<8x256xf32>
    %199 = vector.extract_strided_slice %1 {offsets = [0, 2], sizes = [8, 1], strides = [1, 1]} : vector<8x4xf32> to vector<8x1xf32>
    %200 = vector.extract_strided_slice %185 {offsets = [2, 0], sizes = [1, 256], strides = [1, 1]} : vector<4x256xf32> to vector<1x256xf32>
    %201 = vector.broadcast %199 : vector<8x1xf32> to vector<8x256xf32>
    %202 = vector.broadcast %200 : vector<1x256xf32> to vector<8x256xf32>
    %203 = arith.mulf %201, %202 : vector<8x256xf32>
    %204 = arith.addf %198, %203 : vector<8x256xf32>
    %205 = vector.extract_strided_slice %1 {offsets = [0, 3], sizes = [8, 1], strides = [1, 1]} : vector<8x4xf32> to vector<8x1xf32>
    %206 = vector.extract_strided_slice %185 {offsets = [3, 0], sizes = [1, 256], strides = [1, 1]} : vector<4x256xf32> to vector<1x256xf32>
    %207 = vector.broadcast %205 : vector<8x1xf32> to vector<8x256xf32>
    %208 = vector.broadcast %206 : vector<1x256xf32> to vector<8x256xf32>
    %209 = arith.mulf %207, %208 : vector<8x256xf32>
    %210 = arith.addf %204, %209 : vector<8x256xf32>
    %211 = vector.broadcast %2 : vector<8x1xf32> to vector<8x256xf32>
    %212 = arith.addf %210, %211 : vector<8x256xf32>
    %c1_28 = arith.constant 1 : index
    %c0_29 = arith.constant 0 : index
    %c0_30 = arith.constant 0 : index
    %213 = vector.load %arg6[%c1_28, %c0_29, %c0_30] : memref<2x8x256xf32, #tpu.memory_space<vmem>>, vector<1x8x256xf32>
    %214 = vector.shape_cast %213 : vector<1x8x256xf32> to vector<8x256xf32>
    %215 = vector.shape_cast %212 : vector<8x256xf32> to vector<1x8x256xf32>
    tpu.vector_store %arg6[%c1_28, %c0_29, %c0_30], %215 {strides = array<i32>} : memref<2x8x256xf32, #tpu.memory_space<vmem>>, vector<1x8x256xf32>,
    return
  }
  func.func @transform_0(%arg0: i32) -> (i32, i32, i32) {
    %c0_i32 = arith.constant 0 : i32
    %c0_i32_0 = arith.constant 0 : i32
    %c0_i32_1 = arith.constant 0 : i32
    return %arg0, %c0_i32, %c0_i32_0 : i32, i32, i32
  }
  func.func @transform_1(%arg0: i32) -> (i32, i32) {
    %c0_i32 = arith.constant 0 : i32
    %c0_i32_0 = arith.constant 0 : i32
    %c0_i32_1 = arith.constant 0 : i32
    return %c0_i32, %c0_i32_0 : i32, i32
  }
  func.func @transform_2(%arg0: i32) -> (i32, i32) {
    %c0_i32 = arith.constant 0 : i32
    %c0_i32_0 = arith.constant 0 : i32
    %c0_i32_1 = arith.constant 0 : i32
    return %c0_i32, %c0_i32_0 : i32, i32
  }
  func.func @transform_3(%arg0: i32) -> (i32, i32) {
    %c0_i32 = arith.constant 0 : i32
    %c0_i32_0 = arith.constant 0 : i32
    %c0_i32_1 = arith.constant 0 : i32
    return %c0_i32, %c0_i32_0 : i32, i32
  }
  func.func @transform_4(%arg0: i32) -> (i32, i32) {
    %c0_i32 = arith.constant 0 : i32
    %c0_i32_0 = arith.constant 0 : i32
    %c0_i32_1 = arith.constant 0 : i32
    return %c0_i32, %c0_i32_0 : i32, i32
  }
  func.func @transform_5(%arg0: i32) -> (i32, i32, i32) {
    %c0_i32 = arith.constant 0 : i32
    %c0_i32_0 = arith.constant 0 : i32
    %c0_i32_1 = arith.constant 0 : i32
    return %arg0, %c0_i32, %c0_i32_0 : i32, i32, i32
  }
}

</mosaic_0001>

<llo_original>
// kernel: tpu_custom_call.1
$region0: #{tpu_custom_call.1}
  #allocation0 [shape = 'u32[]', space=smem, size = 0x4, offset = 0x4, fixed_abs, tag = 'smem constant byte address 0x4 - core index']
  #allocation1 [shape = 'u32[144,128]{1,0:T(1,128)}', space=vmem, size = 0x12000, scoped, tag = 'internal scratch']
  %s0 = inlined_call_operand.vmem [shape: f32[2,4,256], index: 0, kind: input, shape index: {}]
  %s1 = inlined_call_operand.vmem [shape: f32[4,9], index: 1, kind: input, shape index: {}]
  %s2 = inlined_call_operand.vmem [shape: f32[8,4], index: 2, kind: input, shape index: {}]
  %s3 = inlined_call_operand.vmem [shape: f32[8,1], index: 3, kind: input, shape index: {}]
  %s4 = inlined_call_operand.hbm [shape: f32[9,256], index: 4, kind: input, shape index: {}]
  %s5 = inlined_call_operand.hbm [shape: f32[2,8,256], index: 5, kind: output, shape index: {}]
  %s6 = sld [smem:[#allocation0]]
  $region34: #{tpu_custom_call.1} parent=0
    _
  %s8 = ssub.s32 1, %s6
  %s9 = scalar_select 0, %s8, %s6
  $region1: #{tpu_custom_call.1} parent=0
    #allocation2 [shape = 'u8[16384]{0}', space=vmem, size = 0x4000, scoped, tag = 'input window, operand 4, single buffered']
    #allocation3 [shape = 's32[1]{0}', space=sflag, size = 0x4, scoped, tag = 'scoped memory for tpu_custom_call.1']
    #allocation4 [shape = 's32[1]{0}', space=sflag, size = 0x4, scoped, tag = 'scoped memory for tpu_custom_call.1']
    #allocation5 [shape = 'u8[16384]{0}', space=vmem, size = 0x4000, scoped, tag = 'output window, operand 0, single buffered']
    %10 = vsyncpa [#allocation3], 0
    %11 = vsyncpa [#allocation4], 0
    // Predicated region
    $region2: #{tpu_custom_call.1} parent=1 // pred_check
      _
    $region3: #{tpu_custom_call.1} parent=1 // pred_check_branch
      %13 = sbr.rel (0) target = $region5
    $region4: #{tpu_custom_call.1} parent=1 // pred_region
      _
    $region5: #{tpu_custom_call.1} parent=1 // pred_fallthru
      _
    // Predicated region
    $region6: #{tpu_custom_call.1} parent=1 // pred_check
      _
    $region7: #{tpu_custom_call.1} parent=1 // pred_check_branch
      %15 = sbr.rel (0) target = $region9
    $region8: #{tpu_custom_call.1} parent=1 // pred_region
      _
    $region9: #{tpu_custom_call.1} parent=1 // pred_fallthru
      _
    // Predicated region
    $region10: #{tpu_custom_call.1} parent=1 // pred_check
      _
    $region11: #{tpu_custom_call.1} parent=1 // pred_check_branch
      %17 = sbr.rel (0) target = $region13
    $region12: #{tpu_custom_call.1} parent=1 // pred_region
      _
    $region13: #{tpu_custom_call.1} parent=1 // pred_fallthru
      _
    // Predicated region
    $region14: #{tpu_custom_call.1} parent=1 // pred_check
      _
    $region15: #{tpu_custom_call.1} parent=1 // pred_check_branch
      %19 = sbr.rel (0) target = $region17
    $region16: #{tpu_custom_call.1} parent=1 // pred_region
      _
    $region17: #{tpu_custom_call.1} parent=1 // pred_fallthru
      _
    // Predicated region
    $region18: #{tpu_custom_call.1} parent=1 // pred_check
      _
    $region19: #{tpu_custom_call.1} parent=1 // pred_check_branch
      %21 = sbr.rel (0) target = $region21
    $region20: #{tpu_custom_call.1} parent=1 // pred_region
      %s23 = ssub.s32 512, 512
      %24 = vsyncadd [#allocation3], %s23
      %s25 = sshll.u32 [#allocation2], 4
      %s26 = int_to_ptr.vmem [resolvable:$true] %s25
      %31 = dma.hbm_to_vmem [thread:$0]  %s4, 512, %s26, [#allocation3], 256, 256, 16
    $region21: #{tpu_custom_call.1} parent=1 // pred_fallthru
      _
    // Predicated region
    $region22: #{tpu_custom_call.1} parent=1 // pred_check
      _
    $region23: #{tpu_custom_call.1} parent=1 // pred_check_branch
      %33 = sbr.rel (0) target = $region25
    $region24: #{tpu_custom_call.1} parent=1 // pred_region
      %34 = dma.done [#allocation3], 512
    $region25: #{tpu_custom_call.1} parent=1 // pred_fallthru
      _
    %v35 = vld [vmem:[%s1] sm:$0xf]
    %v36 = vld [vmem:[%s2] sm:$0xff]
    %v37 = vld [vmem:[%s3] sm:$0xff]
    %v38 = vld [vmem:[#allocation2] sm:$0xff]
    %v39 = vld [vmem:[#allocation2 + $0x8] sm:$0xff]
    %v40 = vld [vmem:[#allocation2 + $0x10] sm:$0x1]
    %v41 = vld [vmem:[#allocation2 + $0x18] sm:$0x1]
    %v42 = vld [vmem:[%s0] sm:$0xff]
    %v43 = vmax.f32 %v42, 0.0
    %v45 = vcombine.high %v43, %v43
    %47 = vrot.lane.b32.xlu0 %v43, 17
    %v48 = vpop.permute.xlu0 %47
    %49 = vrot.lane.b32.xlu0 %v45, 17
    %v50 = vpop.permute.xlu0 %49
    %v51 = vlaneseq
    %v52 = vand.u32 %v51, 127
    %vm53 = vcmp.lt.s32.totalorder %v52, 17
    %v54 = vsel %vm53, %v48, %v50
    %v55 = vsel %vm53, %v50, %v48
    %v56 = vlaneseq
    %v57 = vshrl.u32 %v56, 7
    %v58 = vsub.s32 0, %v57
    %v59 = vrot.slane %v38, %v58
    %v60 = vlaneseq
    %v61 = vshrl.u32 %v60, 7
    %v62 = vsub.s32 0, %v61
    %v63 = vrot.slane %v39, %v62
    %v64 = vmul.f32 %v55, %v59
    %v65 = vmul.f32 %v54, %v63
    %67 = vset.pattern.permute.xlu0 0
    %68 = vperm.xlu0 %67, %v35
    %v69 = vpop.permute.xlu0 %68
    %v71 = vmul.f32 %v64, %v69
    %v72 = vmul.f32 %v65, %v69
    %v73 = vadd.f32 %v71, 0.0
    %v74 = vadd.f32 %v72, 0.0
    %75 = vrot.lane.b32.xlu0 %v43, 16
    %v76 = vpop.permute.xlu0 %75
    %77 = vrot.lane.b32.xlu0 %v45, 16
    %v78 = vpop.permute.xlu0 %77
    %vm79 = vcmp.lt.s32.totalorder %v52, 16
    %v80 = vsel %vm79, %v76, %v78
    %v81 = vsel %vm79, %v78, %v76
    %v82 = vlaneseq
    %v83 = vshrl.u32 %v82, 7
    %v84 = vsub.s32 1, %v83
    %v85 = vrot.slane %v38, %v84
    %v86 = vlaneseq
    %v87 = vshrl.u32 %v86, 7
    %v88 = vsub.s32 1, %v87
    %v89 = vrot.slane %v39, %v88
    %v90 = vmul.f32 %v81, %v85
    %v91 = vmul.f32 %v80, %v89
    %92 = vset.pattern.permute.xlu0 1
    %93 = vperm.xlu0 %92, %v35
    %v94 = vpop.permute.xlu0 %93
    %v96 = vmul.f32 %v90, %v94
    %v97 = vmul.f32 %v91, %v94
    %v98 = vadd.f32 %v73, %v96
    %v99 = vadd.f32 %v74, %v97
    %100 = vrot.lane.b32.xlu0 %v43, 15
    %v101 = vpop.permute.xlu0 %100
    %102 = vrot.lane.b32.xlu0 %v45, 15
    %v103 = vpop.permute.xlu0 %102
    %vm104 = vcmp.lt.s32.totalorder %v52, 15
    %v105 = vsel %vm104, %v101, %v103
    %v106 = vsel %vm104, %v103, %v101
    %v107 = vlaneseq
    %v108 = vshrl.u32 %v107, 7
    %v109 = vsub.s32 2, %v108
    %v110 = vrot.slane %v38, %v109
    %v111 = vlaneseq
    %v112 = vshrl.u32 %v111, 7
    %v113 = vsub.s32 2, %v112
    %v114 = vrot.slane %v39, %v113
    %v115 = vmul.f32 %v106, %v110
    %v116 = vmul.f32 %v105, %v114
    %117 = vset.pattern.permute.xlu0 2
    %118 = vperm.xlu0 %117, %v35
    %v119 = vpop.permute.xlu0 %118
    %v121 = vmul.f32 %v115, %v119
    %v122 = vmul.f32 %v116, %v119
    %v123 = vadd.f32 %v98, %v121
    %v124 = vadd.f32 %v99, %v122
    %125 = vrot.lane.b32.xlu0 %v43, 1
    %v126 = vpop.permute.xlu0 %125
    %127 = vrot.lane.b32.xlu0 %v45, 1
    %v128 = vpop.permute.xlu0 %127
    %vm129 = vcmp.lt.s32.totalorder %v52, 1
    %v130 = vsel %vm129, %v126, %v128
    %v131 = vsel %vm129, %v128, %v126
    %v132 = vlaneseq
    %v133 = vshrl.u32 %v132, 7
    %v134 = vsub.s32 3, %v133
    %v135 = vrot.slane %v38, %v134
    %v136 = vlaneseq
    %v137 = vshrl.u32 %v136, 7
    %v138 = vsub.s32 3, %v137
    %v139 = vrot.slane %v39, %v138
    %v140 = vmul.f32 %v131, %v135
    %v141 = vmul.f32 %v130, %v139
    %142 = vset.pattern.permute.xlu0 3
    %143 = vperm.xlu0 %142, %v35
    %v144 = vpop.permute.xlu0 %143
    %v146 = vmul.f32 %v140, %v144
    %v147 = vmul.f32 %v141, %v144
    %v148 = vadd.f32 %v123, %v146
    %v149 = vadd.f32 %v124, %v147
    %v150 = vlaneseq
    %v151 = vshrl.u32 %v150, 7
    %v152 = vsub.s32 4, %v151
    %v153 = vrot.slane %v38, %v152
    %v154 = vlaneseq
    %v155 = vshrl.u32 %v154, 7
    %v156 = vsub.s32 4, %v155
    %v157 = vrot.slane %v39, %v156
    %v160 = vcombine.low %v153, %v157
    %v162 = vmul.f32 %v43, %v160
    %163 = vset.pattern.permute.xlu0 4
    %164 = vperm.xlu0 %163, %v35
    %v165 = vpop.permute.xlu0 %164
    %v167 = vunpack.c.l.s4 839922192
    %v168 = vunpack.c.0.s8 %v167
    %v169 = vlaneseq
    %v170 = vshrl.u32 %v169, 7
    %v171 = vsub.s32 %v168, %v170
    %v172 = vrot.slane %v165, %v171
    %v174 = vmul.f32 %v162, %v172
    %v176 = vcombine.high %v174, %v174
    %v178 = vadd.f32 %v148, %v174
    %v179 = vadd.f32 %v149, %v176
    %180 = vrot.lane.b32.xlu0 %v43, 127
    %v181 = vpop.permute.xlu0 %180
    %182 = vrot.lane.b32.xlu0 %v45, 127
    %v183 = vpop.permute.xlu0 %182
    %vm184 = vcmp.lt.s32.totalorder %v52, 127
    %v185 = vsel %vm184, %v181, %v183
    %v186 = vsel %vm184, %v183, %v181
    %v187 = vlaneseq
    %v188 = vshrl.u32 %v187, 7
    %v189 = vsub.s32 5, %v188
    %v190 = vrot.slane %v38, %v189
    %v191 = vlaneseq
    %v192 = vshrl.u32 %v191, 7
    %v193 = vsub.s32 5, %v192
    %v194 = vrot.slane %v39, %v193
    %v195 = vmul.f32 %v185, %v190
    %v196 = vmul.f32 %v186, %v194
    %197 = vset.pattern.permute.xlu0 5
    %198 = vperm.xlu0 %197, %v35
    %v199 = vpop.permute.xlu0 %198
    %v201 = vmul.f32 %v195, %v199
    %v202 = vmul.f32 %v196, %v199
    %v203 = vadd.f32 %v178, %v201
    %v204 = vadd.f32 %v179, %v202
    %205 = vrot.lane.b32.xlu0 %v43, 113
    %v206 = vpop.permute.xlu0 %205
    %207 = vrot.lane.b32.xlu0 %v45, 113
    %v208 = vpop.permute.xlu0 %207
    %vm209 = vcmp.lt.s32.totalorder %v52, 113
    %v210 = vsel %vm209, %v206, %v208
    %v211 = vsel %vm209, %v208, %v206
    %v212 = vlaneseq
    %v213 = vshrl.u32 %v212, 7
    %v214 = vsub.s32 6, %v213
    %v215 = vrot.slane %v38, %v214
    %v216 = vlaneseq
    %v217 = vshrl.u32 %v216, 7
    %v218 = vsub.s32 6, %v217
    %v219 = vrot.slane %v39, %v218
    %v220 = vmul.f32 %v210, %v215
    %v221 = vmul.f32 %v211, %v219
    %222 = vset.pattern.permute.xlu0 6
    %223 = vperm.xlu0 %222, %v35
    %v224 = vpop.permute.xlu0 %223
    %v226 = vmul.f32 %v220, %v224
    %v227 = vmul.f32 %v221, %v224
    %v228 = vadd.f32 %v203, %v226
    %v229 = vadd.f32 %v204, %v227
    %230 = vrot.lane.b32.xlu0 %v43, 112
    %v231 = vpop.permute.xlu0 %230
    %232 = vrot.lane.b32.xlu0 %v45, 112
    %v233 = vpop.permute.xlu0 %232
    %vm234 = vcmp.lt.s32.totalorder %v52, 112
    %v235 = vsel %vm234, %v231, %v233
    %v236 = vsel %vm234, %v233, %v231
    %v237 = vlaneseq
    %v238 = vshrl.u32 %v237, 7
    %v239 = vsub.s32 7, %v238
    %v240 = vrot.slane %v38, %v239
    %v241 = vlaneseq
    %v242 = vshrl.u32 %v241, 7
    %v243 = vsub.s32 7, %v242
    %v244 = vrot.slane %v39, %v243
    %v245 = vmul.f32 %v235, %v240
    %v246 = vmul.f32 %v236, %v244
    %247 = vset.pattern.permute.xlu0 7
    %248 = vperm.xlu0 %247, %v35
    %v249 = vpop.permute.xlu0 %248
    %v251 = vmul.f32 %v245, %v249
    %v252 = vmul.f32 %v246, %v249
    %v253 = vadd.f32 %v228, %v251
    %v254 = vadd.f32 %v229, %v252
    %255 = vrot.lane.b32.xlu0 %v43, 111
    %v256 = vpop.permute.xlu0 %255
    %257 = vrot.lane.b32.xlu0 %v45, 111
    %v258 = vpop.permute.xlu0 %257
    %vm259 = vcmp.lt.s32.totalorder %v52, 111
    %v260 = vsel %vm259, %v256, %v258
    %v261 = vsel %vm259, %v258, %v256
    %v262 = vlaneseq
    %v263 = vshrl.u32 %v262, 7
    %v264 = vsub.s32 0, %v263
    %v265 = vrot.slane %v40, %v264
    %v266 = vlaneseq
    %v267 = vshrl.u32 %v266, 7
    %v268 = vsub.s32 0, %v267
    %v269 = vrot.slane %v41, %v268
    %v270 = vmul.f32 %v260, %v265
    %v271 = vmul.f32 %v261, %v269
    %272 = vset.pattern.permute.xlu0 8
    %273 = vperm.xlu0 %272, %v35
    %v274 = vpop.permute.xlu0 %273
    %v276 = vmul.f32 %v270, %v274
    %v277 = vmul.f32 %v271, %v274
    %v278 = vadd.f32 %v253, %v276
    %v279 = vadd.f32 %v254, %v277
    %281 = vset.pattern.permute.xlu0 0
    %282 = vperm.xlu0 %281, %v36
    %v283 = vpop.permute.xlu0 %282
    %v285 = vlaneseq
    %v286 = vshrl.u32 %v285, 7
    %v287 = vsub.s32 0, %v286
    %v288 = vrot.slane %v278, %v287
    %v289 = vlaneseq
    %v290 = vshrl.u32 %v289, 7
    %v291 = vsub.s32 0, %v290
    %v292 = vrot.slane %v279, %v291
    %v293 = vmul.f32 %v283, %v288
    %v294 = vmul.f32 %v283, %v292
    %v295 = vadd.f32 %v293, 0.0
    %v296 = vadd.f32 %v294, 0.0
    %297 = vset.pattern.permute.xlu0 1
    %298 = vperm.xlu0 %297, %v36
    %v299 = vpop.permute.xlu0 %298
    %v301 = vlaneseq
    %v302 = vshrl.u32 %v301, 7
    %v303 = vsub.s32 1, %v302
    %v304 = vrot.slane %v278, %v303
    %v305 = vlaneseq
    %v306 = vshrl.u32 %v305, 7
    %v307 = vsub.s32 1, %v306
    %v308 = vrot.slane %v279, %v307
    %v309 = vmul.f32 %v299, %v304
    %v310 = vmul.f32 %v299, %v308
    %v311 = vadd.f32 %v295, %v309
    %v312 = vadd.f32 %v296, %v310
    %313 = vset.pattern.permute.xlu0 2
    %314 = vperm.xlu0 %313, %v36
    %v315 = vpop.permute.xlu0 %314
    %v317 = vlaneseq
    %v318 = vshrl.u32 %v317, 7
    %v319 = vsub.s32 2, %v318
    %v320 = vrot.slane %v278, %v319
    %v321 = vlaneseq
    %v322 = vshrl.u32 %v321, 7
    %v323 = vsub.s32 2, %v322
    %v324 = vrot.slane %v279, %v323
    %v325 = vmul.f32 %v315, %v320
    %v326 = vmul.f32 %v315, %v324
    %v327 = vadd.f32 %v311, %v325
    %v328 = vadd.f32 %v312, %v326
    %329 = vset.pattern.permute.xlu0 3
    %330 = vperm.xlu0 %329, %v36
    %v331 = vpop.permute.xlu0 %330
    %v333 = vlaneseq
    %v334 = vshrl.u32 %v333, 7
    %v335 = vsub.s32 3, %v334
    %v336 = vrot.slane %v278, %v335
    %v337 = vlaneseq
    %v338 = vshrl.u32 %v337, 7
    %v339 = vsub.s32 3, %v338
    %v340 = vrot.slane %v279, %v339
    %v341 = vmul.f32 %v331, %v336
    %v342 = vmul.f32 %v331, %v340
    %v343 = vadd.f32 %v327, %v341
    %v344 = vadd.f32 %v328, %v342
    %346 = vset.pattern.permute.xlu0 0
    %347 = vperm.xlu0 %346, %v37
    %v348 = vpop.permute.xlu0 %347
    %v350 = vadd.f32 %v343, %v348
    %v351 = vadd.f32 %v344, %v348
    %352 = vst [vmem:[#allocation5] sm:$0xff] %v350
    %353 = vst [vmem:[#allocation5 + $0x8] sm:$0xff] %v351
    %s354 = scalar_lea.vmem %s0, 8
    %v355 = vld [vmem:[%s354] sm:$0xff]
    %v356 = vmax.f32 %v355, 0.0
    %v358 = vcombine.high %v356, %v356
    %360 = vrot.lane.b32.xlu0 %v356, 17
    %v361 = vpop.permute.xlu0 %360
    %362 = vrot.lane.b32.xlu0 %v358, 17
    %v363 = vpop.permute.xlu0 %362
    %v364 = vsel %vm53, %v361, %v363
    %v365 = vsel %vm53, %v363, %v361
    %v366 = vmul.f32 %v365, %v59
    %v367 = vmul.f32 %v364, %v63
    %v368 = vmul.f32 %v366, %v69
    %v369 = vmul.f32 %v367, %v69
    %v370 = vadd.f32 %v368, 0.0
    %v371 = vadd.f32 %v369, 0.0
    %372 = vrot.lane.b32.xlu0 %v356, 16
    %v373 = vpop.permute.xlu0 %372
    %374 = vrot.lane.b32.xlu0 %v358, 16
    %v375 = vpop.permute.xlu0 %374
    %v376 = vsel %vm79, %v373, %v375
    %v377 = vsel %vm79, %v375, %v373
    %v378 = vmul.f32 %v377, %v85
    %v379 = vmul.f32 %v376, %v89
    %v380 = vmul.f32 %v378, %v94
    %v381 = vmul.f32 %v379, %v94
    %v382 = vadd.f32 %v370, %v380
    %v383 = vadd.f32 %v371, %v381
    %384 = vrot.lane.b32.xlu0 %v356, 15
    %v385 = vpop.permute.xlu0 %384
    %386 = vrot.lane.b32.xlu0 %v358, 15
    %v387 = vpop.permute.xlu0 %386
    %v388 = vsel %vm104, %v385, %v387
    %v389 = vsel %vm104, %v387, %v385
    %v390 = vmul.f32 %v389, %v110
    %v391 = vmul.f32 %v388, %v114
    %v392 = vmul.f32 %v390, %v119
    %v393 = vmul.f32 %v391, %v119
    %v394 = vadd.f32 %v382, %v392
    %v395 = vadd.f32 %v383, %v393
    %396 = vrot.lane.b32.xlu0 %v356, 1
    %v397 = vpop.permute.xlu0 %396
    %398 = vrot.lane.b32.xlu0 %v358, 1
    %v399 = vpop.permute.xlu0 %398
    %v400 = vsel %vm129, %v397, %v399
    %v401 = vsel %vm129, %v399, %v397
    %v402 = vmul.f32 %v401, %v135
    %v403 = vmul.f32 %v400, %v139
    %v404 = vmul.f32 %v402, %v144
    %v405 = vmul.f32 %v403, %v144
    %v406 = vadd.f32 %v394, %v404
    %v407 = vadd.f32 %v395, %v405
    %v408 = vmul.f32 %v356, %v160
    %v409 = vmul.f32 %v408, %v172
    %v411 = vcombine.high %v409, %v409
    %v413 = vadd.f32 %v406, %v409
    %v414 = vadd.f32 %v407, %v411
    %415 = vrot.lane.b32.xlu0 %v356, 127
    %v416 = vpop.permute.xlu0 %415
    %417 = vrot.lane.b32.xlu0 %v358, 127
    %v418 = vpop.permute.xlu0 %417
    %v419 = vsel %vm184, %v416, %v418
    %v420 = vsel %vm184, %v418, %v416
    %v421 = vmul.f32 %v419, %v190
    %v422 = vmul.f32 %v420, %v194
    %v423 = vmul.f32 %v421, %v199
    %v424 = vmul.f32 %v422, %v199
    %v425 = vadd.f32 %v413, %v423
    %v426 = vadd.f32 %v414, %v424
    %427 = vrot.lane.b32.xlu0 %v356, 113
    %v428 = vpop.permute.xlu0 %427
    %429 = vrot.lane.b32.xlu0 %v358, 113
    %v430 = vpop.permute.xlu0 %429
    %v431 = vsel %vm209, %v428, %v430
    %v432 = vsel %vm209, %v430, %v428
    %v433 = vmul.f32 %v431, %v215
    %v434 = vmul.f32 %v432, %v219
    %v435 = vmul.f32 %v433, %v224
    %v436 = vmul.f32 %v434, %v224
    %v437 = vadd.f32 %v425, %v435
    %v438 = vadd.f32 %v426, %v436
    %439 = vrot.lane.b32.xlu0 %v356, 112
    %v440 = vpop.permute.xlu0 %439
    %441 = vrot.lane.b32.xlu0 %v358, 112
    %v442 = vpop.permute.xlu0 %441
    %v443 = vsel %vm234, %v440, %v442
    %v444 = vsel %vm234, %v442, %v440
    %v445 = vmul.f32 %v443, %v240
    %v446 = vmul.f32 %v444, %v244
    %v447 = vmul.f32 %v445, %v249
    %v448 = vmul.f32 %v446, %v249
    %v449 = vadd.f32 %v437, %v447
    %v450 = vadd.f32 %v438, %v448
    %451 = vrot.lane.b32.xlu0 %v356, 111
    %v452 = vpop.permute.xlu0 %451
    %453 = vrot.lane.b32.xlu0 %v358, 111
    %v454 = vpop.permute.xlu0 %453
    %v455 = vsel %vm259, %v452, %v454
    %v456 = vsel %vm259, %v454, %v452
    %v457 = vmul.f32 %v455, %v265
    %v458 = vmul.f32 %v456, %v269
    %v459 = vmul.f32 %v457, %v274
    %v460 = vmul.f32 %v458, %v274
    %v461 = vadd.f32 %v449, %v459
    %v462 = vadd.f32 %v450, %v460
    %v463 = vlaneseq
    %v464 = vshrl.u32 %v463, 7
    %v465 = vsub.s32 0, %v464
    %v466 = vrot.slane %v461, %v465
    %v467 = vlaneseq
    %v468 = vshrl.u32 %v467, 7
    %v469 = vsub.s32 0, %v468
    %v470 = vrot.slane %v462, %v469
    %v471 = vmul.f32 %v283, %v466
    %v472 = vmul.f32 %v283, %v470
    %v473 = vadd.f32 %v471, 0.0
    %v474 = vadd.f32 %v472, 0.0
    %v475 = vlaneseq
    %v476 = vshrl.u32 %v475, 7
    %v477 = vsub.s32 1, %v476
    %v478 = vrot.slane %v461, %v477
    %v479 = vlaneseq
    %v480 = vshrl.u32 %v479, 7
    %v481 = vsub.s32 1, %v480
    %v482 = vrot.slane %v462, %v481
    %v483 = vmul.f32 %v299, %v478
    %v484 = vmul.f32 %v299, %v482
    %v485 = vadd.f32 %v473, %v483
    %v486 = vadd.f32 %v474, %v484
    %v487 = vlaneseq
    %v488 = vshrl.u32 %v487, 7
    %v489 = vsub.s32 2, %v488
    %v490 = vrot.slane %v461, %v489
    %v491 = vlaneseq
    %v492 = vshrl.u32 %v491, 7
    %v493 = vsub.s32 2, %v492
    %v494 = vrot.slane %v462, %v493
    %v495 = vmul.f32 %v315, %v490
    %v496 = vmul.f32 %v315, %v494
    %v497 = vadd.f32 %v485, %v495
    %v498 = vadd.f32 %v486, %v496
    %v499 = vlaneseq
    %v500 = vshrl.u32 %v499, 7
    %v501 = vsub.s32 3, %v500
    %v502 = vrot.slane %v461, %v501
    %v503 = vlaneseq
    %v504 = vshrl.u32 %v503, 7
    %v505 = vsub.s32 3, %v504
    %v506 = vrot.slane %v462, %v505
    %v507 = vmul.f32 %v331, %v502
    %v508 = vmul.f32 %v331, %v506
    %v509 = vadd.f32 %v497, %v507
    %v510 = vadd.f32 %v498, %v508
    %v511 = vadd.f32 %v509, %v348
    %v512 = vadd.f32 %v510, %v348
    %s513 = scalar_lea.vmem [#allocation5], 16
    %514 = vst [vmem:[%s513] sm:$0xff] %v511
    %515 = vst [vmem:[%s513 + $0x8] sm:$0xff] %v512
    // Predicated region
    $region26: #{tpu_custom_call.1} parent=1 // pred_check
      _
    $region27: #{tpu_custom_call.1} parent=1 // pred_check_branch
      %517 = sbr.rel (0) target = $region29
    $region28: #{tpu_custom_call.1} parent=1 // pred_region
      %s519 = ssub.s32 512, 512
      %520 = vsyncadd [#allocation4], %s519
      %s521 = sshll.u32 [#allocation5], 4
      %s522 = int_to_ptr.vmem [resolvable:$true] %s521
      %527 = dma.vmem_to_hbm [thread:$0]  %s522, 512, %s5, [#allocation4], 256, 256, 16
    $region29: #{tpu_custom_call.1} parent=1 // pred_fallthru
      _
    // Predicated region
    $region30: #{tpu_custom_call.1} parent=1 // pred_check
      _
    $region31: #{tpu_custom_call.1} parent=1 // pred_check_branch
      %529 = sbr.rel (0) target = $region33
    $region32: #{tpu_custom_call.1} parent=1 // pred_region
      %530 = dma.done [#allocation4], 512
    $region33: #{tpu_custom_call.1} parent=1 // pred_fallthru
      _
    %531 = vsyncpa [#allocation3], 1
    %532 = vsyncpa [#allocation4], 1

</llo_original>
